<compile_context>
chip_gen: v5e
topology: v5e:2x2
jax: 0.10.0
libtpu: 0.0.40
codegen_flags: <defaults>
</compile_context>

<pallas_src>
import numpy as np
import jax
import jax.numpy as jnp
from jax.experimental import pallas as pl
from jax.experimental.pallas import tpu as pltpu


_TILE_E = 1024  # edge-tile lane width for the calibration kernel


def _round_up(x, m):
    return ((x + m - 1) // m) * m


# ----------------------------- Pallas kernels ------------------------------ #

def _calib_damp_kernel(edge_ref, w1t_ref, b1_ref, w2t_ref, b2_ref, w3_ref,
                       b3_ref, out_ref):
    """Fused two-channel calibration MLP + sigmoid + damped message update.

    Lane-dense layout (edges on the 128-lane axis):
      edge_ref : (10, TILE_E) rows = [m0, o0, m1, o1, m0r, m1r, o0r, ps0, ps1, ps0d]
      w1t (H,4), b1 (H,1), w2t (H,H), b2 (H,1), w3 (H,1), b3 (1,1)
      out_ref  : (2, TILE_E) rows = [new_m0, new_m1]
    """
    m0 = edge_ref[0:1, :]
    o0 = edge_ref[1:2, :]
    m1 = edge_ref[2:3, :]
    o1 = edge_ref[3:4, :]
    m0r = edge_ref[4:5, :]
    m1r = edge_ref[5:6, :]
    o0r = edge_ref[6:7, :]
    ps0 = edge_ref[7:8, :]
    ps1 = edge_ref[8:9, :]
    ps0d = edge_ref[9:10, :]

    w1t = w1t_ref[...]
    b1 = b1_ref[...]
    w2t = w2t_ref[...]
    b2 = b2_ref[...]
    w3 = w3_ref[...]
    b3 = b3_ref[...]

    def calib_alpha(f_msg, f_old, f_prob, f_rev):
        # layer 1: K=4 -> four VPU broadcast-FMA terms (degenerate for the MXU)
        h = (w1t[:, 0:1] * f_msg + w1t[:, 1:2] * f_old +
             w1t[:, 2:3] * f_prob + w1t[:, 3:4] * f_rev + b1)
        h = jnp.maximum(h, 0.0)
        # layer 2: (H,H) @ (H,TILE_E) — N (edges) lane-dense on the MXU
        h = jnp.dot(w2t, h, preferred_element_type=jnp.float32) + b2
        h = jnp.maximum(h, 0.0)
        # layer 3: N=1 -> sublane reduction (XLU) instead of a degenerate matmul
        logit = jnp.sum(w3 * h, axis=0, keepdims=True) + b3
        return jax.nn.sigmoid(logit)        # EUP

    # channel 0 at edge e
    a0 = calib_alpha(m0, o0, ps0, m0r + m1r)
    new_m0 = (1.0 - a0) * m0 + a0 * o0
    # channel 0 evaluated at rev(e): recomputed from rev-permuted inputs
    # (rev is an involution) so no in-kernel gather of the damped msg0 is needed.
    a0r = calib_alpha(m0r, o0r, ps0d, m0 + m1)
    new_m0_rev = (1.0 - a0r) * m0r + a0r * o0r
    # channel 1 at edge e — uses the freshly damped msg0 at rev(e) (torch order)
    a1 = calib_alpha(m1, o1, ps1, m1r + new_m0_rev)
    new_m1 = (1.0 - a1) * m1 + a1 * o1

    out_ref[0:1, :] = new_m0
    out_ref[1:2, :] = new_m1


def _norm_exp_kernel(p_ref, out_ref):
    # 2-state softmax == sigmoid of the logit difference; nodes are lane-dense,
    # no cross-lane reduction, the transcendental goes to the EUP slot.
    p0 = p_ref[0:1, :]
    p1 = p_ref[1:2, :]
    out_ref[0:1, :] = jax.nn.sigmoid(p0 - p1)
    out_ref[1:2, :] = jax.nn.sigmoid(p1 - p0)


# --------------------------- device-side wrappers --------------------------- #

def _calib_core(messages, old_messages, probs, src, rev, dst,
                w1t, b1c, w2t, b2c, w3c, b3c):
    """One outer-iteration calibration of both message channels, on device.

    messages, old_messages : (n_E, 2) f32     probs : (n_V, 2) f32
    src, rev, dst          : (n_E,)  int32    weights in kernel layout.
    Returns the damped messages, (n_E, 2) f32.
    """
    n_e = messages.shape[0]
    h_dim = w1t.shape[0]

    m = messages.T            # (2, n_E): channels on sublanes, edges on lanes
    o = old_messages.T
    p = probs.T               # (2, n_V)

    m0, m1 = m[0], m[1]
    o0, o1 = o[0], o[1]
    m0r = m0[rev]
    m1r = m1[rev]
    o0r = o0[rev]
    ps0 = p[0, src]
    ps1 = p[1, src]
    ps0d = p[0, dst]          # probs[:, 0] at the edge destination (= src[rev])

    edge = jnp.stack([m0, o0, m1, o1, m0r, m1r, o0r, ps0, ps1, ps0d], axis=0)

    e_pad = _round_up(max(n_e, 1), 128)
    if e_pad <= _TILE_E:
        tile_e = e_pad
    else:
        e_pad = _round_up(e_pad, _TILE_E)
        tile_e = _TILE_E
    num_tiles = e_pad // tile_e
    edge = jnp.pad(edge, ((0, 0), (0, e_pad - n_e)))

    grid_spec = pltpu.PrefetchScalarGridSpec(
        num_scalar_prefetch=0,
        grid=(num_tiles,),
        in_specs=[
            pl.BlockSpec((10, tile_e), lambda i: (0, i)),
            pl.BlockSpec((h_dim, 4), lambda i: (0, 0)),
            pl.BlockSpec((h_dim, 1), lambda i: (0, 0)),
            pl.BlockSpec((h_dim, h_dim), lambda i: (0, 0)),
            pl.BlockSpec((h_dim, 1), lambda i: (0, 0)),
            pl.BlockSpec((h_dim, 1), lambda i: (0, 0)),
            pl.BlockSpec((1, 1), lambda i: (0, 0)),
        ],
        out_specs=pl.BlockSpec((2, tile_e), lambda i: (0, i)),
    )

    new_m = pl.pallas_call(
        _calib_damp_kernel,
        out_shape=jax.ShapeDtypeStruct((2, e_pad), jnp.float32),
        grid_spec=grid_spec,
        compiler_params=pltpu.CompilerParams(
            dimension_semantics=("parallel",)),
    )(edge, w1t, b1c, w2t, b2c, w3c, b3c)

    return new_m[:, :n_e].T


_calib_step = jax.jit(_calib_core)


@jax.jit
def _calib_iter(messages, old_messages, bxi, src, rev, dst,
                w1t, b1c, w2t, b2c, w3c, b3c):
    """Node-belief scatter-add + fused two-channel calibration, on device."""
    probs = bxi.at[dst].add(messages)          # probs[i] = b[i]*xi + sum_in msg
    return _calib_core(messages, old_messages, probs, src, rev, dst,
                       w1t, b1c, w2t, b2c, w3c, b3c)


def _norm_exp_core(probs):
    """Row-softmax over the 2 states, nodes lane-dense."""
    n_v = probs.shape[0]
    v_pad = _round_up(max(n_v, 1), 128)
    p = jnp.pad(probs.T, ((0, 0), (0, v_pad - n_v)))   # (2, v_pad)
    out = pl.pallas_call(
        _norm_exp_kernel,
        out_shape=jax.ShapeDtypeStruct((2, v_pad), jnp.float32),
        in_specs=[pl.BlockSpec(memory_space=pltpu.MemorySpace.VMEM)],
        out_specs=pl.BlockSpec(memory_space=pltpu.MemorySpace.VMEM),
    )(p)
    return out[:, :n_v].T


_norm_exp = jax.jit(_norm_exp_core)


@jax.jit
def _final_marginals(messages, bxi, dst):
    probs = bxi.at[dst].add(messages)
    return _norm_exp_core(probs)


# ------------------------------ numpy helpers ------------------------------ #

def _logsumexp_axis1(x):
    # x: (deg, 2, 2) -> (deg, 2), matches torch.logsumexp(x, dim=1)
    m = np.max(x, axis=1, keepdims=True)
    return (m + np.log(np.sum(np.exp(x - m), axis=1, keepdims=True)))[:, 0, :]


def _build_graph_tables(J, n_V):
    row, col = np.where(J)
    n_E = len(row)
    degrees = np.sum(J != 0, axis=0).astype(np.int64)
    index_bases = np.zeros(n_V, dtype=np.int64)
    for i in range(1, n_V):
        index_bases[i] = index_bases[i - 1] + degrees[i - 1]
    neighbors = {i: [] for i in range(n_V)}
    for i, j in zip(row, col):
        neighbors[int(i)].append(int(j))
    neighbors = {k: sorted(v) for k, v in neighbors.items()}
    ordered_nodes = np.argsort(degrees)
    src = np.zeros(n_E, dtype=np.int64)
    rev = np.zeros(n_E, dtype=np.int64)
    for i in range(n_V):
        for k, j in enumerate(neighbors[i]):
            e = int(index_bases[i]) + k
            src[e] = i
            rev[e] = int(index_bases[j]) + neighbors[j].index(i)
    dst = src[rev] if n_E > 0 else src.copy()
    return (neighbors, index_bases, degrees, ordered_nodes,
            src, rev, dst, n_V, n_E)


def _to_kernel_params(w1, b1, w2, b2, w3, b3):
    """Pre-transpose MLP params into the (features-on-sublanes) kernel layout."""
    w1 = jnp.asarray(w1, jnp.float32)   # (4, H)
    b1 = jnp.asarray(b1, jnp.float32)   # (1, H)
    w2 = jnp.asarray(w2, jnp.float32)   # (H, H)
    b2 = jnp.asarray(b2, jnp.float32)   # (1, H)
    w3 = jnp.asarray(w3, jnp.float32)   # (H, 1)
    b3 = jnp.asarray(b3, jnp.float32)   # (1, 1)
    return (w1.T, b1.reshape(-1, 1), w2.T, b2.reshape(-1, 1),
            w3.reshape(-1, 1), b3.reshape(1, 1))


def _calib_step_reference_np(messages, old, probs, src, rev,
                             w1, b1, w2, b2, w3, b3):
    """Pure-numpy reference of one calibration/damping step (torch semantics)."""
    def mlp_sig(x):
        h = np.maximum(x @ w1 + b1, 0.0)
        h = np.maximum(h @ w2 + b2, 0.0)
        z = h @ w3 + b3
        return 1.0 / (1.0 + np.exp(-z))

    msg0 = messages[:, 0:1].copy()
    msg1 = messages[:, 1:2].copy()
    old0 = old[:, 0:1]
    old1 = old[:, 1:2]
    f0 = np.concatenate([probs[src, 0:1], msg0[rev] + msg1[rev]], axis=1)
    a0 = mlp_sig(np.concatenate([msg0, old0, f0], axis=1))
    msg0 = (1.0 - a0) * msg0 + a0 * old0
    f1 = np.concatenate([probs[src, 1:2], msg1[rev] + msg0[rev]], axis=1)
    a1 = mlp_sig(np.concatenate([msg1, old1, f1], axis=1))
    msg1 = (1.0 - a1) * msg1 + a1 * old1
    return np.concatenate([msg0, msg1], axis=1)


# --------------------------------- model ----------------------------------- #

class GGNN:
    def __init__(self, state_dim, message_dim, hidden_unit_message_dim,
                 hidden_unit_readout_dim, n_steps=10):
        self.mode = 'marginal'
        self.state_dim = state_dim
        self.n_steps = n_steps
        self.message_dim = message_dim
        self.hidden_unit_message_dim = hidden_unit_message_dim
        H = hidden_unit_readout_dim
        self.hidden_unit_readout_dim = H
        # _initialization() in the torch reference zero-fills every nn.Linear.
        self.w1 = jnp.zeros((4, H), jnp.float32)
        self.b1 = jnp.zeros((1, H), jnp.float32)
        self.w2 = jnp.zeros((H, H), jnp.float32)
        self.b2 = jnp.zeros((1, H), jnp.float32)
        self.w3 = jnp.zeros((H, 1), jnp.float32)
        self.b3 = jnp.zeros((1, 1), jnp.float32)

    def forward(self, J, b):
        max_iters = 10
        J = np.asarray(J, dtype=np.float32)
        b = np.asarray(b, dtype=np.float32)

        (neighbors, index_bases, degrees, ordered_nodes,
         src, rev, dst, n_V, n_E) = _build_graph_tables(J, len(b))

        xij = np.array([[1.0, -1.0], [-1.0, 1.0]], np.float32)
        xi = np.array([-1.0, 1.0], np.float32)

        # static per-node tables (constant across iterations)
        node_blocks = []
        for i in range(n_V):
            base = int(index_bases[i])
            deg = int(degrees[i])
            if deg == 0:
                node_blocks.append((base, 0, None))
                continue
            nb = neighbors[i]
            Jij = J[i, nb].astype(np.float32)
            local_pot = (Jij.reshape(-1, 1, 1) * xij
                         + b[i] * xi.reshape(-1, 1)).astype(np.float32)
            node_blocks.append((base, deg, local_pot))

        # device-resident graph index tables, b*xi and calibration weights
        # (one upload per forward())
        src_d = jnp.asarray(src, jnp.int32)
        rev_d = jnp.asarray(rev, jnp.int32)
        dst_d = jnp.asarray(dst, jnp.int32)
        bxi_d = jnp.asarray(b[:, None] * xi[None, :], jnp.float32)
        params_d = _to_kernel_params(self.w1, self.b1, self.w2, self.b2,
                                     self.w3, self.b3)

        messages = np.zeros((n_E, 2), dtype=np.float32)   # log(1) = 0

        for _ in range(max_iters):
            old_messages = messages.copy()

            # TODO(synk): sequential per-node BP sweep (data-dependent in-place
            #             scatter; later nodes read earlier nodes' fresh
            #             messages) has no clean Pallas equivalent; host numpy.
            for i in ordered_nodes:
                base, deg, local_pot = node_blocks[int(i)]
                if deg == 0:
                    continue
                sl = slice(base, base + deg)
                incoming = messages[rev[sl]]                     # (deg, 2)
                out_msg = incoming.sum(axis=0)[None, :] - incoming
                seg = out_msg.reshape(deg, 2, 1) + local_pot
                messages[sl] = _logsumexp_axis1(seg)

            # node-belief scatter-add + fused two-channel calibration +
            # damping — a single jitted device step (one Pallas call).
            # NOTE: explicit writable copy — np.asarray on a jax.Array is
            #       read-only and would break the in-place sweep above.
            messages = np.array(
                _calib_iter(jnp.asarray(messages), jnp.asarray(old_messages),
                            bxi_d, src_d, rev_d, dst_d, *params_d),
                dtype=np.float32, copy=True)

        # final beliefs + 2-state softmax, entirely on device
        if self.mode == 'marginal':
            results = np.asarray(
                _final_marginals(jnp.asarray(messages), bxi_d, dst_d))
        return results


# ---------------------------------- main ------------------------------------ #

if __name__ == "__main__":
    key = jax.random.PRNGKey(0)
    k1, k2, k3 = jax.random.split(key, 3)

    n_V = 8
    # symmetric graph: ring + 4 chords -> n_E = 24 directed edges
    und_edges = [(i, (i + 1) % n_V) for i in range(n_V)] + \
                [(0, 4), (1, 5), (2, 6), (3, 7)]
    vals = np.asarray(jax.random.uniform(k1, (len(und_edges),),
                                         minval=-1.0, maxval=1.0), np.float32)
    J = np.zeros((n_V, n_V), np.float32)
    for (i, j), v in zip(und_edges, vals):
        J[i, j] = v
        J[j, i] = v
    b = np.asarray(jax.random.normal(k2, (n_V,)), np.float32) * 0.5

    model = GGNN(state_dim=2, message_dim=2, hidden_unit_message_dim=32,
                 hidden_unit_readout_dim=32, n_steps=10)
    out = model.forward(J, b)
    out = jax.block_until_ready(jnp.asarray(out))

    assert out.shape == (n_V, 2)
    assert bool(jnp.all(jnp.isfinite(out)))
    assert bool(jnp.allclose(jnp.sum(out, axis=1), 1.0, atol=1e-5))

    # --- check the fused Pallas calibration kernel with NONZERO weights ------
    H = 32
    graph = _build_graph_tables(J, n_V)
    src_t, rev_t, dst_t, n_E_t = graph[4], graph[5], graph[6], graph[8]
    rng = np.random.RandomState(0)
    w1 = (0.3 * rng.randn(4, H)).astype(np.float32)
    b1 = (0.1 * rng.randn(1, H)).astype(np.float32)
    w2 = (0.3 * rng.randn(H, H)).astype(np.float32)
    b2 = (0.1 * rng.randn(1, H)).astype(np.float32)
    w3 = (0.3 * rng.randn(H, 1)).astype(np.float32)
    b3 = (0.1 * rng.randn(1, 1)).astype(np.float32)
    msgs_t = rng.randn(n_E_t, 2).astype(np.float32)
    olds_t = rng.randn(n_E_t, 2).astype(np.float32)
    prbs_t = rng.randn(n_V, 2).astype(np.float32)
    ref_c = _calib_step_reference_np(msgs_t, olds_t, prbs_t, src_t, rev_t,
                                     w1, b1, w2, b2, w3, b3)
    got_c = np.asarray(_calib_step(
        jnp.asarray(msgs_t), jnp.asarray(olds_t), jnp.asarray(prbs_t),
        jnp.asarray(src_t, jnp.int32), jnp.asarray(rev_t, jnp.int32),
        jnp.asarray(dst_t, jnp.int32),
        *_to_kernel_params(w1, b1, w2, b2, w3, b3)))
    assert got_c.shape == ref_c.shape
    assert np.all(np.isfinite(got_c))
    assert np.allclose(got_c, ref_c, atol=3e-3, rtol=3e-3)

    # --- check the 2-state softmax kernel against a numpy softmax ------------
    p_test = np.asarray(jax.random.normal(k3, (n_V, 2)), np.float32)
    got_p = np.asarray(_norm_exp(jnp.asarray(p_test)))
    m_ = p_test.max(axis=1, keepdims=True)
    e_ = np.exp(p_test - m_)
    ref_p = e_ / e_.sum(axis=1, keepdims=True)
    assert np.allclose(got_p, ref_p, atol=1e-5)

    print("KERNEL_OK")
</pallas_src>

<mosaic_0001>
module attributes {stable_mosaic.version = 11 : i64} {
  func.func @_calib_damp_kernel(%arg0: i32, %arg1: memref<10x128xf32, #tpu.memory_space<vmem>>, %arg2: memref<32x4xf32, #tpu.memory_space<vmem>>, %arg3: memref<32x1xf32, #tpu.memory_space<vmem>>, %arg4: memref<32x32xf32, #tpu.memory_space<vmem>>, %arg5: memref<32x1xf32, #tpu.memory_space<vmem>>, %arg6: memref<32x1xf32, #tpu.memory_space<vmem>>, %arg7: memref<1x1xf32, #tpu.memory_space<vmem>>, %arg8: memref<2x128xf32, #tpu.memory_space<vmem>>) attributes {dimension_semantics = [#tpu.dimension_semantics<parallel>], iteration_bounds = array<i64: 1>, scalar_prefetch = 0 : i64, scratch_operands = 0 : i64, tpu.core_type = #tpu.core_type<tc>, window_params = [{transform_indices = @transform_0, window_bounds = array<i64: 10, 128>}, {pipeline_mode = #tpu.pipeline_mode<synchronous>, transform_indices = @transform_1, window_bounds = array<i64: 32, 4>}, {pipeline_mode = #tpu.pipeline_mode<synchronous>, transform_indices = @transform_2, window_bounds = array<i64: 32, 1>}, {pipeline_mode = #tpu.pipeline_mode<synchronous>, transform_indices = @transform_3, window_bounds = array<i64: 32, 32>}, {pipeline_mode = #tpu.pipeline_mode<synchronous>, transform_indices = @transform_4, window_bounds = array<i64: 32, 1>}, {pipeline_mode = #tpu.pipeline_mode<synchronous>, transform_indices = @transform_5, window_bounds = array<i64: 32, 1>}, {pipeline_mode = #tpu.pipeline_mode<synchronous>, transform_indices = @transform_6, window_bounds = array<i64: 1, 1>}, {transform_indices = @transform_7, window_bounds = array<i64: 2, 128>}]} {
    %c0 = arith.constant 0 : index
    %c0_0 = arith.constant 0 : index
    %0 = vector.load %arg1[%c0, %c0_0] : memref<10x128xf32, #tpu.memory_space<vmem>>, vector<1x128xf32>
    %c1 = arith.constant 1 : index
    %c0_1 = arith.constant 0 : index
    %1 = vector.load %arg1[%c1, %c0_1] : memref<10x128xf32, #tpu.memory_space<vmem>>, vector<1x128xf32>
    %c2 = arith.constant 2 : index
    %c0_2 = arith.constant 0 : index
    %2 = vector.load %arg1[%c2, %c0_2] : memref<10x128xf32, #tpu.memory_space<vmem>>, vector<1x128xf32>
    %c3 = arith.constant 3 : index
    %c0_3 = arith.constant 0 : index
    %3 = vector.load %arg1[%c3, %c0_3] : memref<10x128xf32, #tpu.memory_space<vmem>>, vector<1x128xf32>
    %c4 = arith.constant 4 : index
    %c0_4 = arith.constant 0 : index
    %4 = vector.load %arg1[%c4, %c0_4] : memref<10x128xf32, #tpu.memory_space<vmem>>, vector<1x128xf32>
    %c5 = arith.constant 5 : index
    %c0_5 = arith.constant 0 : index
    %5 = vector.load %arg1[%c5, %c0_5] : memref<10x128xf32, #tpu.memory_space<vmem>>, vector<1x128xf32>
    %c6 = arith.constant 6 : index
    %c0_6 = arith.constant 0 : index
    %6 = vector.load %arg1[%c6, %c0_6] : memref<10x128xf32, #tpu.memory_space<vmem>>, vector<1x128xf32>
    %c7 = arith.constant 7 : index
    %c0_7 = arith.constant 0 : index
    %7 = vector.load %arg1[%c7, %c0_7] : memref<10x128xf32, #tpu.memory_space<vmem>>, vector<1x128xf32>
    %c8 = arith.constant 8 : index
    %c0_8 = arith.constant 0 : index
    %8 = vector.load %arg1[%c8, %c0_8] : memref<10x128xf32, #tpu.memory_space<vmem>>, vector<1x128xf32>
    %c9 = arith.constant 9 : index
    %c0_9 = arith.constant 0 : index
    %9 = vector.load %arg1[%c9, %c0_9] : memref<10x128xf32, #tpu.memory_space<vmem>>, vector<1x128xf32>
    %c0_10 = arith.constant 0 : index
    %c0_11 = arith.constant 0 : index
    %10 = vector.load %arg2[%c0_10, %c0_11] : memref<32x4xf32, #tpu.memory_space<vmem>>, vector<32x4xf32>
    %c0_12 = arith.constant 0 : index
    %c0_13 = arith.constant 0 : index
    %11 = vector.load %arg3[%c0_12, %c0_13] : memref<32x1xf32, #tpu.memory_space<vmem>>, vector<32x1xf32>
    %c0_14 = arith.constant 0 : index
    %c0_15 = arith.constant 0 : index
    %12 = vector.load %arg4[%c0_14, %c0_15] : memref<32x32xf32, #tpu.memory_space<vmem>>, vector<32x32xf32>
    %c0_16 = arith.constant 0 : index
    %c0_17 = arith.constant 0 : index
    %13 = vector.load %arg5[%c0_16, %c0_17] : memref<32x1xf32, #tpu.memory_space<vmem>>, vector<32x1xf32>
    %c0_18 = arith.constant 0 : index
    %c0_19 = arith.constant 0 : index
    %14 = vector.load %arg6[%c0_18, %c0_19] : memref<32x1xf32, #tpu.memory_space<vmem>>, vector<32x1xf32>
    %c0_20 = arith.constant 0 : index
    %c0_21 = arith.constant 0 : index
    %15 = vector.load %arg7[%c0_20, %c0_21] : memref<1x1xf32, #tpu.memory_space<vmem>>, vector<1x1xf32>
    %16 = arith.addf %4, %5 : vector<1x128xf32>
    %17 = vector.extract_strided_slice %10 {offsets = [0, 0], sizes = [32, 1], strides = [1, 1]} : vector<32x4xf32> to vector<32x1xf32>
    %18 = vector.broadcast %17 : vector<32x1xf32> to vector<32x128xf32>
    %19 = vector.broadcast %0 : vector<1x128xf32> to vector<32x128xf32>
    %20 = arith.mulf %18, %19 : vector<32x128xf32>
    %21 = vector.extract_strided_slice %10 {offsets = [0, 1], sizes = [32, 1], strides = [1, 1]} : vector<32x4xf32> to vector<32x1xf32>
    %22 = vector.broadcast %21 : vector<32x1xf32> to vector<32x128xf32>
    %23 = vector.broadcast %1 : vector<1x128xf32> to vector<32x128xf32>
    %24 = arith.mulf %22, %23 : vector<32x128xf32>
    %25 = arith.addf %20, %24 : vector<32x128xf32>
    %26 = vector.extract_strided_slice %10 {offsets = [0, 2], sizes = [32, 1], strides = [1, 1]} : vector<32x4xf32> to vector<32x1xf32>
    %27 = vector.broadcast %26 : vector<32x1xf32> to vector<32x128xf32>
    %28 = vector.broadcast %7 : vector<1x128xf32> to vector<32x128xf32>
    %29 = arith.mulf %27, %28 : vector<32x128xf32>
    %30 = arith.addf %25, %29 : vector<32x128xf32>
    %31 = vector.extract_strided_slice %10 {offsets = [0, 3], sizes = [32, 1], strides = [1, 1]} : vector<32x4xf32> to vector<32x1xf32>
    %32 = vector.broadcast %31 : vector<32x1xf32> to vector<32x128xf32>
    %33 = vector.broadcast %16 : vector<1x128xf32> to vector<32x128xf32>
    %34 = arith.mulf %32, %33 : vector<32x128xf32>
    %35 = arith.addf %30, %34 : vector<32x128xf32>
    %36 = vector.broadcast %11 : vector<32x1xf32> to vector<32x128xf32>
    %37 = arith.addf %35, %36 : vector<32x128xf32>
    %cst = arith.constant 0.000000e+00 : f32
    %38 = vector.broadcast %cst : f32 to vector<32x128xf32>
    %39 = arith.maximumf %37, %38 : vector<32x128xf32>
    %cst_22 = arith.constant dense<0.000000e+00> : vector<32x128xf32>
    %40 = tpu.matmul %12, %39, %cst_22 {dimension_numbers = #tpu.dot_dimension_numbers<[1], [0], [0], [1], [0, 0, 1, 1], [], []>} : vector<32x32xf32>, vector<32x128xf32>, vector<32x128xf32> -> vector<32x128xf32>
    %41 = vector.broadcast %13 : vector<32x1xf32> to vector<32x128xf32>
    %42 = arith.addf %40, %41 : vector<32x128xf32>
    %cst_23 = arith.constant 0.000000e+00 : f32
    %43 = vector.broadcast %cst_23 : f32 to vector<32x128xf32>
    %44 = arith.maximumf %42, %43 : vector<32x128xf32>
    %45 = vector.broadcast %14 : vector<32x1xf32> to vector<32x128xf32>
    %46 = arith.mulf %45, %44 : vector<32x128xf32>
    %cst_24 = arith.constant dense<0.000000e+00> : vector<128xf32>
    %47 = vector.multi_reduction <add>, %46, %cst_24 [0] : vector<32x128xf32> to vector<128xf32>
    %48 = vector.shape_cast %47 : vector<128xf32> to vector<1x128xf32>
    %49 = vector.broadcast %15 : vector<1x1xf32> to vector<1x128xf32>
    %50 = arith.addf %48, %49 : vector<1x128xf32>
    %51 = arith.negf %50 : vector<1x128xf32>
    %52 = math.exp %51 : vector<1x128xf32>
    %cst_25 = arith.constant 1.000000e+00 : f32
    %53 = vector.broadcast %cst_25 : f32 to vector<1x128xf32>
    %54 = arith.addf %53, %52 : vector<1x128xf32>
    %55 = arith.divf %53, %54 : vector<1x128xf32>
    %cst_26 = arith.constant 1.000000e+00 : f32
    %56 = vector.broadcast %cst_26 : f32 to vector<1x128xf32>
    %57 = arith.subf %56, %55 : vector<1x128xf32>
    %58 = arith.mulf %57, %0 : vector<1x128xf32>
    %59 = arith.mulf %55, %1 : vector<1x128xf32>
    %60 = arith.addf %58, %59 : vector<1x128xf32>
    %61 = arith.addf %0, %2 : vector<1x128xf32>
    %62 = vector.extract_strided_slice %10 {offsets = [0, 0], sizes = [32, 1], strides = [1, 1]} : vector<32x4xf32> to vector<32x1xf32>
    %63 = vector.broadcast %62 : vector<32x1xf32> to vector<32x128xf32>
    %64 = vector.broadcast %4 : vector<1x128xf32> to vector<32x128xf32>
    %65 = arith.mulf %63, %64 : vector<32x128xf32>
    %66 = vector.extract_strided_slice %10 {offsets = [0, 1], sizes = [32, 1], strides = [1, 1]} : vector<32x4xf32> to vector<32x1xf32>
    %67 = vector.broadcast %66 : vector<32x1xf32> to vector<32x128xf32>
    %68 = vector.broadcast %6 : vector<1x128xf32> to vector<32x128xf32>
    %69 = arith.mulf %67, %68 : vector<32x128xf32>
    %70 = arith.addf %65, %69 : vector<32x128xf32>
    %71 = vector.extract_strided_slice %10 {offsets = [0, 2], sizes = [32, 1], strides = [1, 1]} : vector<32x4xf32> to vector<32x1xf32>
    %72 = vector.broadcast %71 : vector<32x1xf32> to vector<32x128xf32>
    %73 = vector.broadcast %9 : vector<1x128xf32> to vector<32x128xf32>
    %74 = arith.mulf %72, %73 : vector<32x128xf32>
    %75 = arith.addf %70, %74 : vector<32x128xf32>
    %76 = vector.extract_strided_slice %10 {offsets = [0, 3], sizes = [32, 1], strides = [1, 1]} : vector<32x4xf32> to vector<32x1xf32>
    %77 = vector.broadcast %76 : vector<32x1xf32> to vector<32x128xf32>
    %78 = vector.broadcast %61 : vector<1x128xf32> to vector<32x128xf32>
    %79 = arith.mulf %77, %78 : vector<32x128xf32>
    %80 = arith.addf %75, %79 : vector<32x128xf32>
    %81 = vector.broadcast %11 : vector<32x1xf32> to vector<32x128xf32>
    %82 = arith.addf %80, %81 : vector<32x128xf32>
    %cst_27 = arith.constant 0.000000e+00 : f32
    %83 = vector.broadcast %cst_27 : f32 to vector<32x128xf32>
    %84 = arith.maximumf %82, %83 : vector<32x128xf32>
    %cst_28 = arith.constant dense<0.000000e+00> : vector<32x128xf32>
    %85 = tpu.matmul %12, %84, %cst_28 {dimension_numbers = #tpu.dot_dimension_numbers<[1], [0], [0], [1], [0, 0, 1, 1], [], []>} : vector<32x32xf32>, vector<32x128xf32>, vector<32x128xf32> -> vector<32x128xf32>
    %86 = vector.broadcast %13 : vector<32x1xf32> to vector<32x128xf32>
    %87 = arith.addf %85, %86 : vector<32x128xf32>
    %cst_29 = arith.constant 0.000000e+00 : f32
    %88 = vector.broadcast %cst_29 : f32 to vector<32x128xf32>
    %89 = arith.maximumf %87, %88 : vector<32x128xf32>
    %90 = vector.broadcast %14 : vector<32x1xf32> to vector<32x128xf32>
    %91 = arith.mulf %90, %89 : vector<32x128xf32>
    %cst_30 = arith.constant dense<0.000000e+00> : vector<128xf32>
    %92 = vector.multi_reduction <add>, %91, %cst_30 [0] : vector<32x128xf32> to vector<128xf32>
    %93 = vector.shape_cast %92 : vector<128xf32> to vector<1x128xf32>
    %94 = vector.broadcast %15 : vector<1x1xf32> to vector<1x128xf32>
    %95 = arith.addf %93, %94 : vector<1x128xf32>
    %96 = arith.negf %95 : vector<1x128xf32>
    %97 = math.exp %96 : vector<1x128xf32>
    %cst_31 = arith.constant 1.000000e+00 : f32
    %98 = vector.broadcast %cst_31 : f32 to vector<1x128xf32>
    %99 = arith.addf %98, %97 : vector<1x128xf32>
    %100 = arith.divf %98, %99 : vector<1x128xf32>
    %cst_32 = arith.constant 1.000000e+00 : f32
    %101 = vector.broadcast %cst_32 : f32 to vector<1x128xf32>
    %102 = arith.subf %101, %100 : vector<1x128xf32>
    %103 = arith.mulf %102, %4 : vector<1x128xf32>
    %104 = arith.mulf %100, %6 : vector<1x128xf32>
    %105 = arith.addf %103, %104 : vector<1x128xf32>
    %106 = arith.addf %5, %105 : vector<1x128xf32>
    %107 = vector.extract_strided_slice %10 {offsets = [0, 0], sizes = [32, 1], strides = [1, 1]} : vector<32x4xf32> to vector<32x1xf32>
    %108 = vector.broadcast %107 : vector<32x1xf32> to vector<32x128xf32>
    %109 = vector.broadcast %2 : vector<1x128xf32> to vector<32x128xf32>
    %110 = arith.mulf %108, %109 : vector<32x128xf32>
    %111 = vector.extract_strided_slice %10 {offsets = [0, 1], sizes = [32, 1], strides = [1, 1]} : vector<32x4xf32> to vector<32x1xf32>
    %112 = vector.broadcast %111 : vector<32x1xf32> to vector<32x128xf32>
    %113 = vector.broadcast %3 : vector<1x128xf32> to vector<32x128xf32>
    %114 = arith.mulf %112, %113 : vector<32x128xf32>
    %115 = arith.addf %110, %114 : vector<32x128xf32>
    %116 = vector.extract_strided_slice %10 {offsets = [0, 2], sizes = [32, 1], strides = [1, 1]} : vector<32x4xf32> to vector<32x1xf32>
    %117 = vector.broadcast %116 : vector<32x1xf32> to vector<32x128xf32>
    %118 = vector.broadcast %8 : vector<1x128xf32> to vector<32x128xf32>
    %119 = arith.mulf %117, %118 : vector<32x128xf32>
    %120 = arith.addf %115, %119 : vector<32x128xf32>
    %121 = vector.extract_strided_slice %10 {offsets = [0, 3], sizes = [32, 1], strides = [1, 1]} : vector<32x4xf32> to vector<32x1xf32>
    %122 = vector.broadcast %121 : vector<32x1xf32> to vector<32x128xf32>
    %123 = vector.broadcast %106 : vector<1x128xf32> to vector<32x128xf32>
    %124 = arith.mulf %122, %123 : vector<32x128xf32>
    %125 = arith.addf %120, %124 : vector<32x128xf32>
    %126 = vector.broadcast %11 : vector<32x1xf32> to vector<32x128xf32>
    %127 = arith.addf %125, %126 : vector<32x128xf32>
    %cst_33 = arith.constant 0.000000e+00 : f32
    %128 = vector.broadcast %cst_33 : f32 to vector<32x128xf32>
    %129 = arith.maximumf %127, %128 : vector<32x128xf32>
    %cst_34 = arith.constant dense<0.000000e+00> : vector<32x128xf32>
    %130 = tpu.matmul %12, %129, %cst_34 {dimension_numbers = #tpu.dot_dimension_numbers<[1], [0], [0], [1], [0, 0, 1, 1], [], []>} : vector<32x32xf32>, vector<32x128xf32>, vector<32x128xf32> -> vector<32x128xf32>
    %131 = vector.broadcast %13 : vector<32x1xf32> to vector<32x128xf32>
    %132 = arith.addf %130, %131 : vector<32x128xf32>
    %cst_35 = arith.constant 0.000000e+00 : f32
    %133 = vector.broadcast %cst_35 : f32 to vector<32x128xf32>
    %134 = arith.maximumf %132, %133 : vector<32x128xf32>
    %135 = vector.broadcast %14 : vector<32x1xf32> to vector<32x128xf32>
    %136 = arith.mulf %135, %134 : vector<32x128xf32>
    %cst_36 = arith.constant dense<0.000000e+00> : vector<128xf32>
    %137 = vector.multi_reduction <add>, %136, %cst_36 [0] : vector<32x128xf32> to vector<128xf32>
    %138 = vector.shape_cast %137 : vector<128xf32> to vector<1x128xf32>
    %139 = vector.broadcast %15 : vector<1x1xf32> to vector<1x128xf32>
    %140 = arith.addf %138, %139 : vector<1x128xf32>
    %141 = arith.negf %140 : vector<1x128xf32>
    %142 = math.exp %141 : vector<1x128xf32>
    %cst_37 = arith.constant 1.000000e+00 : f32
    %143 = vector.broadcast %cst_37 : f32 to vector<1x128xf32>
    %144 = arith.addf %143, %142 : vector<1x128xf32>
    %145 = arith.divf %143, %144 : vector<1x128xf32>
    %cst_38 = arith.constant 1.000000e+00 : f32
    %146 = vector.broadcast %cst_38 : f32 to vector<1x128xf32>
    %147 = arith.subf %146, %145 : vector<1x128xf32>
    %148 = arith.mulf %147, %2 : vector<1x128xf32>
    %149 = arith.mulf %145, %3 : vector<1x128xf32>
    %150 = arith.addf %148, %149 : vector<1x128xf32>
    %c0_39 = arith.constant 0 : index
    %c0_40 = arith.constant 0 : index
    %151 = vector.load %arg8[%c0_39, %c0_40] : memref<2x128xf32, #tpu.memory_space<vmem>>, vector<1x128xf32>
    tpu.vector_store %arg8[%c0_39, %c0_40], %60 {strides = array<i32>} : memref<2x128xf32, #tpu.memory_space<vmem>>, vector<1x128xf32>,
    %c1_41 = arith.constant 1 : index
    %c0_42 = arith.constant 0 : index
    %152 = vector.load %arg8[%c1_41, %c0_42] : memref<2x128xf32, #tpu.memory_space<vmem>>, vector<1x128xf32>
    tpu.vector_store %arg8[%c1_41, %c0_42], %150 {strides = array<i32>} : memref<2x128xf32, #tpu.memory_space<vmem>>, vector<1x128xf32>,
    return
  }
  func.func @transform_0(%arg0: i32) -> (i32, i32) {
    %c0_i32 = arith.constant 0 : i32
    %c0_i32_0 = arith.constant 0 : i32
    return %c0_i32, %arg0 : i32, i32
  }
  func.func @transform_1(%arg0: i32) -> (i32, i32) {
    %c0_i32 = arith.constant 0 : i32
    %c0_i32_0 = arith.constant 0 : i32
    %c0_i32_1 = arith.constant 0 : i32
    return %c0_i32, %c0_i32_0 : i32, i32
  }
  func.func @transform_2(%arg0: i32) -> (i32, i32) {
    %c0_i32 = arith.constant 0 : i32
    %c0_i32_0 = arith.constant 0 : i32
    %c0_i32_1 = arith.constant 0 : i32
    return %c0_i32, %c0_i32_0 : i32, i32
  }
  func.func @transform_3(%arg0: i32) -> (i32, i32) {
    %c0_i32 = arith.constant 0 : i32
    %c0_i32_0 = arith.constant 0 : i32
    %c0_i32_1 = arith.constant 0 : i32
    return %c0_i32, %c0_i32_0 : i32, i32
  }
  func.func @transform_4(%arg0: i32) -> (i32, i32) {
    %c0_i32 = arith.constant 0 : i32
    %c0_i32_0 = arith.constant 0 : i32
    %c0_i32_1 = arith.constant 0 : i32
    return %c0_i32, %c0_i32_0 : i32, i32
  }
  func.func @transform_5(%arg0: i32) -> (i32, i32) {
    %c0_i32 = arith.constant 0 : i32
    %c0_i32_0 = arith.constant 0 : i32
    %c0_i32_1 = arith.constant 0 : i32
    return %c0_i32, %c0_i32_0 : i32, i32
  }
  func.func @transform_6(%arg0: i32) -> (i32, i32) {
    %c0_i32 = arith.constant 0 : i32
    %c0_i32_0 = arith.constant 0 : i32
    %c0_i32_1 = arith.constant 0 : i32
    return %c0_i32, %c0_i32_0 : i32, i32
  }
  func.func @transform_7(%arg0: i32) -> (i32, i32) {
    %c0_i32 = arith.constant 0 : i32
    %c0_i32_0 = arith.constant 0 : i32
    return %c0_i32, %arg0 : i32, i32
  }
}

</mosaic_0001>

<llo_original>
// kernel: _calib_iter.1
$region0: #{_calib_iter.1}
  #allocation0 [shape = 'u32[]', space=smem, size = 0x4, offset = 0x4, fixed_abs, tag = 'smem constant byte address 0x4 - core index']
  #allocation1 [shape = 'u32[72,128]{1,0:T(1,128)}', space=vmem, size = 0x9000, scoped, tag = 'internal scratch']
  #allocation2 [shape = 'f32[1,1]{1,0:T(1,128)S(1)}', space=vmem, size = 0x200, scoped, tag = 'scoped memory for _calib_iter.1']
  %s0 = inlined_call_operand.vmem [shape: f32[10,128], index: 0, kind: input, shape index: {}]
  %s1 = inlined_call_operand.vmem [shape: f32[32,4], index: 1, kind: input, shape index: {}]
  %s2 = inlined_call_operand.vmem [shape: f32[32,1], index: 2, kind: input, shape index: {}]
  %s3 = inlined_call_operand.vmem [shape: f32[32,32], index: 3, kind: input, shape index: {}]
  %s4 = inlined_call_operand.vmem [shape: f32[32,1], index: 4, kind: input, shape index: {}]
  %s5 = inlined_call_operand.vmem [shape: f32[32,1], index: 5, kind: input, shape index: {}]
  %s6 = inlined_call_operand.<no memory space> [shape: f32[1,1], index: 6, kind: input, shape index: {}]
  %s7 = inlined_call_operand.vmem [shape: f32[2,128], index: 7, kind: output, shape index: {}]
  %s8 = sld [smem:[#allocation0]]
  $region38: #{_calib_iter.1} parent=0
    _
  %s10 = ssub.s32 1, %s8
  %s11 = scalar_select 0, %s10, %s8
  %v12 = vstv %s6
  %13 = vst [vmem:[#allocation2] sm:$0x1] %v12
  // Predicated region
  $region2: #{_calib_iter.1} parent=0 // pred_check
    _
  $region3: #{_calib_iter.1} parent=0 // pred_check_branch
    %15 = sbr.rel (0) target = $region5
  $region4: #{_calib_iter.1} parent=0 // pred_region
    _
  $region5: #{_calib_iter.1} parent=0 // pred_fallthru
    _
  // Predicated region
  $region6: #{_calib_iter.1} parent=0 // pred_check
    _
  $region7: #{_calib_iter.1} parent=0 // pred_check_branch
    %17 = sbr.rel (0) target = $region9
  $region8: #{_calib_iter.1} parent=0 // pred_region
    _
  $region9: #{_calib_iter.1} parent=0 // pred_fallthru
    _
  // Predicated region
  $region10: #{_calib_iter.1} parent=0 // pred_check
    _
  $region11: #{_calib_iter.1} parent=0 // pred_check_branch
    %19 = sbr.rel (0) target = $region13
  $region12: #{_calib_iter.1} parent=0 // pred_region
    _
  $region13: #{_calib_iter.1} parent=0 // pred_fallthru
    _
  // Predicated region
  $region14: #{_calib_iter.1} parent=0 // pred_check
    _
  $region15: #{_calib_iter.1} parent=0 // pred_check_branch
    %21 = sbr.rel (0) target = $region17
  $region16: #{_calib_iter.1} parent=0 // pred_region
    _
  $region17: #{_calib_iter.1} parent=0 // pred_fallthru
    _
  // Predicated region
  $region18: #{_calib_iter.1} parent=0 // pred_check
    _
  $region19: #{_calib_iter.1} parent=0 // pred_check_branch
    %23 = sbr.rel (0) target = $region21
  $region20: #{_calib_iter.1} parent=0 // pred_region
    _
  $region21: #{_calib_iter.1} parent=0 // pred_fallthru
    _
  // Predicated region
  $region22: #{_calib_iter.1} parent=0 // pred_check
    _
  $region23: #{_calib_iter.1} parent=0 // pred_check_branch
    %25 = sbr.rel (0) target = $region25
  $region24: #{_calib_iter.1} parent=0 // pred_region
    _
  $region25: #{_calib_iter.1} parent=0 // pred_fallthru
    _
  // Predicated region
  $region26: #{_calib_iter.1} parent=0 // pred_check
    _
  $region27: #{_calib_iter.1} parent=0 // pred_check_branch
    %27 = sbr.rel (0) target = $region29
  $region28: #{_calib_iter.1} parent=0 // pred_region
    _
  $region29: #{_calib_iter.1} parent=0 // pred_fallthru
    _
  %v28 = vld [vmem:[%s0] sm:$0x1]
  %v29 = vld [vmem:[%s0 + $0x1] sm:$0x1]
  %v30 = vld [vmem:[%s0 + $0x2] sm:$0x1]
  %v31 = vld [vmem:[%s0 + $0x3] sm:$0x1]
  %v32 = vld [vmem:[%s0 + $0x4] sm:$0x1]
  %v33 = vld [vmem:[%s0 + $0x5] sm:$0x1]
  %v34 = vld [vmem:[%s0 + $0x6] sm:$0x1]
  %v35 = vld [vmem:[%s0 + $0x7] sm:$0x1]
  %v36 = vld [vmem:[%s0 + $0x8] sm:$0x1]
  %v37 = vld [vmem:[%s0 + $0x9] sm:$0x1]
  %v38 = vld [vmem:[%s1] sm:$0xff]
  %v39 = vld [vmem:[%s1 + $0x8] sm:$0xff]
  %v40 = vld [vmem:[%s1 + $0x10] sm:$0xff]
  %v41 = vld [vmem:[%s1 + $0x18] sm:$0xff]
  %v42 = vld [vmem:[%s2] sm:$0xff]
  %v43 = vld [vmem:[%s2 + $0x8] sm:$0xff]
  %v44 = vld [vmem:[%s2 + $0x10] sm:$0xff]
  %v45 = vld [vmem:[%s2 + $0x18] sm:$0xff]
  %v46 = vld [vmem:[%s3] sm:$0xff]
  %v47 = vld [vmem:[%s3 + $0x8] sm:$0xff]
  %v48 = vld [vmem:[%s3 + $0x10] sm:$0xff]
  %v49 = vld [vmem:[%s3 + $0x18] sm:$0xff]
  %v50 = vld [vmem:[%s4] sm:$0xff]
  %v51 = vld [vmem:[%s4 + $0x8] sm:$0xff]
  %v52 = vld [vmem:[%s4 + $0x10] sm:$0xff]
  %v53 = vld [vmem:[%s4 + $0x18] sm:$0xff]
  %v54 = vld [vmem:[%s5] sm:$0xff]
  %v55 = vld [vmem:[%s5 + $0x8] sm:$0xff]
  %v56 = vld [vmem:[%s5 + $0x10] sm:$0xff]
  %v57 = vld [vmem:[%s5 + $0x18] sm:$0xff]
  %v58 = vld [vmem:[#allocation2] sm:$0x1]
  %v59 = vadd.f32 %v32, %v33
  %61 = vset.pattern.permute.xlu0 0
  %62 = vperm.xlu0 %61, %v38
  %v63 = vpop.permute.xlu0 %62
  %66 = vset.pattern.permute.xlu0 0
  %67 = vperm.xlu0 %66, %v39
  %v68 = vpop.permute.xlu0 %67
  %71 = vset.pattern.permute.xlu0 0
  %72 = vperm.xlu0 %71, %v40
  %v73 = vpop.permute.xlu0 %72
  %76 = vset.pattern.permute.xlu0 0
  %77 = vperm.xlu0 %76, %v41
  %v78 = vpop.permute.xlu0 %77
  %v80 = vperm.slane %v28, 0
  %v81 = vmul.f32 %v63, %v80
  %v82 = vmul.f32 %v68, %v80
  %v83 = vmul.f32 %v73, %v80
  %v84 = vmul.f32 %v78, %v80
  %85 = vset.pattern.permute.xlu0 1
  %86 = vperm.xlu0 %85, %v38
  %v87 = vpop.permute.xlu0 %86
  %89 = vset.pattern.permute.xlu0 1
  %90 = vperm.xlu0 %89, %v39
  %v91 = vpop.permute.xlu0 %90
  %93 = vset.pattern.permute.xlu0 1
  %94 = vperm.xlu0 %93, %v40
  %v95 = vpop.permute.xlu0 %94
  %97 = vset.pattern.permute.xlu0 1
  %98 = vperm.xlu0 %97, %v41
  %v99 = vpop.permute.xlu0 %98
  %v101 = vperm.slane %v29, 0
  %v102 = vmul.f32 %v87, %v101
  %v103 = vmul.f32 %v91, %v101
  %v104 = vmul.f32 %v95, %v101
  %v105 = vmul.f32 %v99, %v101
  %v106 = vadd.f32 %v81, %v102
  %v107 = vadd.f32 %v82, %v103
  %v108 = vadd.f32 %v83, %v104
  %v109 = vadd.f32 %v84, %v105
  %110 = vset.pattern.permute.xlu0 2
  %111 = vperm.xlu0 %110, %v38
  %v112 = vpop.permute.xlu0 %111
  %114 = vset.pattern.permute.xlu0 2
  %115 = vperm.xlu0 %114, %v39
  %v116 = vpop.permute.xlu0 %115
  %118 = vset.pattern.permute.xlu0 2
  %119 = vperm.xlu0 %118, %v40
  %v120 = vpop.permute.xlu0 %119
  %122 = vset.pattern.permute.xlu0 2
  %123 = vperm.xlu0 %122, %v41
  %v124 = vpop.permute.xlu0 %123
  %v126 = vperm.slane %v35, 0
  %v127 = vmul.f32 %v112, %v126
  %v128 = vmul.f32 %v116, %v126
  %v129 = vmul.f32 %v120, %v126
  %v130 = vmul.f32 %v124, %v126
  %v131 = vadd.f32 %v106, %v127
  %v132 = vadd.f32 %v107, %v128
  %v133 = vadd.f32 %v108, %v129
  %v134 = vadd.f32 %v109, %v130
  %135 = vset.pattern.permute.xlu0 3
  %136 = vperm.xlu0 %135, %v38
  %v137 = vpop.permute.xlu0 %136
  %139 = vset.pattern.permute.xlu0 3
  %140 = vperm.xlu0 %139, %v39
  %v141 = vpop.permute.xlu0 %140
  %143 = vset.pattern.permute.xlu0 3
  %144 = vperm.xlu0 %143, %v40
  %v145 = vpop.permute.xlu0 %144
  %147 = vset.pattern.permute.xlu0 3
  %148 = vperm.xlu0 %147, %v41
  %v149 = vpop.permute.xlu0 %148
  %v151 = vperm.slane %v59, 0
  %v152 = vmul.f32 %v137, %v151
  %v153 = vmul.f32 %v141, %v151
  %v154 = vmul.f32 %v145, %v151
  %v155 = vmul.f32 %v149, %v151
  %v156 = vadd.f32 %v131, %v152
  %v157 = vadd.f32 %v132, %v153
  %v158 = vadd.f32 %v133, %v154
  %v159 = vadd.f32 %v134, %v155
  %161 = vset.pattern.permute.xlu0 0
  %162 = vperm.xlu0 %161, %v42
  %v163 = vpop.permute.xlu0 %162
  %166 = vset.pattern.permute.xlu0 0
  %167 = vperm.xlu0 %166, %v43
  %v168 = vpop.permute.xlu0 %167
  %171 = vset.pattern.permute.xlu0 0
  %172 = vperm.xlu0 %171, %v44
  %v173 = vpop.permute.xlu0 %172
  %176 = vset.pattern.permute.xlu0 0
  %177 = vperm.xlu0 %176, %v45
  %v178 = vpop.permute.xlu0 %177
  %v180 = vadd.f32 %v156, %v163
  %v181 = vadd.f32 %v157, %v168
  %v182 = vadd.f32 %v158, %v173
  %v183 = vadd.f32 %v159, %v178
  %v184 = vmax.f32 %v180, 0.0
  %v185 = vmax.f32 %v181, 0.0
  %v186 = vmax.f32 %v182, 0.0
  %v187 = vmax.f32 %v183, 0.0
  %189 = vset.pattern.permute.xlu0 0
  %190 = vperm.xlu0 %189, %v50
  %v191 = vpop.permute.xlu0 %190
  %194 = vset.pattern.permute.xlu0 0
  %195 = vperm.xlu0 %194, %v51
  %v196 = vpop.permute.xlu0 %195
  %199 = vset.pattern.permute.xlu0 0
  %200 = vperm.xlu0 %199, %v52
  %v201 = vpop.permute.xlu0 %200
  %204 = vset.pattern.permute.xlu0 0
  %205 = vperm.xlu0 %204, %v53
  %v206 = vpop.permute.xlu0 %205
  %vm208 = vcmask 261120
  %v210 = vsel %vm208, %v46, 0
  %v213 = vsel %vm208, %v47, 0
  %v216 = vsel %vm208, %v48, 0
  %v219 = vsel %vm208, %v49, 0
  %221 = vmatpush.msra.mxu0 0.0
  %222 = vmatpush.msra.mxu0 0.0
  %223 = vmatpush.msra.mxu0 0.0
  %224 = vmatpush.msra.mxu0 0.0
  %225 = vmatpush.msra.mxu0 0.0
  %226 = vmatpush.msra.mxu0 0.0
  %227 = vmatpush.msra.mxu0 0.0
  %228 = vmatpush.msra.mxu0 0.0
  %229 = vmatpush.msra.mxu0 0.0
  %230 = vmatpush.msra.mxu0 0.0
  %231 = vmatpush.msra.mxu0 0.0
  %232 = vmatpush.msra.mxu0 0.0
  %233 = vmatpush.msra.mxu0 %v187
  %234 = vmatpush.msra.mxu0 %v186
  %235 = vmatpush.msra.mxu0 %v185
  %236 = vmatpush.msra.mxu0 %v184
  %237 = vmatmul.f32.gmra.mxu0 %v210
  %v238 = vpop.f32.mrf.mxu0
  %v239 = vadd.f32 %v191, %v238
  %240 = vmatmul.f32.gmra.mxu0 %v213
  %v241 = vpop.f32.mrf.mxu0
  %v242 = vadd.f32 %v196, %v241
  %243 = vmatmul.f32.gmra.mxu0 %v216
  %v244 = vpop.f32.mrf.mxu0
  %v245 = vadd.f32 %v201, %v244
  %246 = vmatmul.f32.gmra.mxu0 %v219
  %v247 = vpop.f32.mrf.mxu0
  %v248 = vadd.f32 %v206, %v247
  %249 = vdwg.mxu0
  %v250 = vmax.f32 %v239, 0.0
  %v251 = vmax.f32 %v242, 0.0
  %v252 = vmax.f32 %v245, 0.0
  %v253 = vmax.f32 %v248, 0.0
  %255 = vset.pattern.permute.xlu0 0
  %256 = vperm.xlu0 %255, %v54
  %v257 = vpop.permute.xlu0 %256
  %260 = vset.pattern.permute.xlu0 0
  %261 = vperm.xlu0 %260, %v55
  %v262 = vpop.permute.xlu0 %261
  %265 = vset.pattern.permute.xlu0 0
  %266 = vperm.xlu0 %265, %v56
  %v267 = vpop.permute.xlu0 %266
  %270 = vset.pattern.permute.xlu0 0
  %271 = vperm.xlu0 %270, %v57
  %v272 = vpop.permute.xlu0 %271
  %v274 = vmul.f32 %v257, %v250
  %v275 = vmul.f32 %v262, %v251
  %v276 = vmul.f32 %v267, %v252
  %v277 = vmul.f32 %v272, %v253
  %v278 = vadd.f32 %v274, %v275
  %v279 = vadd.f32 %v278, %v276
  %v280 = vadd.f32 %v279, %v277
  %v281 = vrot.slane %v280, 4
  %v282 = vadd.f32 %v280, %v281
  %v283 = vrot.slane %v282, 2
  %v284 = vadd.f32 %v282, %v283
  %v285 = vrot.slane %v284, 1
  %v286 = vadd.f32 %v284, %v285
  %288 = vset.pattern.permute.xlu0 0
  %289 = vperm.xlu0 %288, %v58
  %v290 = vpop.permute.xlu0 %289
  %v292 = vperm.slane %v290, 0
  %v293 = vadd.f32 %v286, %v292
  %v294 = vxor.u32 %v293, 2147483648
  %v295 = vmul.f32 %v294, 1.442695
  %v296 = vpow.pop %v295
  %v297 = vadd.f32 %v296, 1.0
  %v298 = vrcp.pop %v297
  %v299 = vmul.f32 %v297, %v298
  %v300 = vsub.f32 1.0, %v299
  %v301 = vmul.f32 %v298, %v300
  %v302 = vadd.f32 %v298, %v301
  %vm303 = vweird.f32 %v297
  %vm304 = vweird.f32 %v298
  %vm305 = vmor %vm303, %vm304
  %v306 = vsel %vm305, %v298, %v302
  %v307 = vand.u32 2147483647, %v297
  %vm308 = vcmp.eq.f32.partialorder %v307, 8.507059e+37
  %v309 = vand.u32 %v297, 2147483648
  %v310 = vor.u32 1.1754944e-38, %v309
  %v311 = vsel %vm308, %v310, %v306
  %v312 = vmul.f32 1.0, %v311
  %v313 = vsub.f32 1.0, %v312
  %v314 = vmul.f32 %v313, %v28
  %v315 = vmul.f32 %v312, %v29
  %v316 = vadd.f32 %v314, %v315
  %v317 = vadd.f32 %v28, %v30
  %v318 = vperm.slane %v32, 0
  %v319 = vmul.f32 %v63, %v318
  %v320 = vmul.f32 %v68, %v318
  %v321 = vmul.f32 %v73, %v318
  %v322 = vmul.f32 %v78, %v318
  %v323 = vperm.slane %v34, 0
  %v324 = vmul.f32 %v87, %v323
  %v325 = vmul.f32 %v91, %v323
  %v326 = vmul.f32 %v95, %v323
  %v327 = vmul.f32 %v99, %v323
  %v328 = vadd.f32 %v319, %v324
  %v329 = vadd.f32 %v320, %v325
  %v330 = vadd.f32 %v321, %v326
  %v331 = vadd.f32 %v322, %v327
  %v332 = vperm.slane %v37, 0
  %v333 = vmul.f32 %v112, %v332
  %v334 = vmul.f32 %v116, %v332
  %v335 = vmul.f32 %v120, %v332
  %v336 = vmul.f32 %v124, %v332
  %v337 = vadd.f32 %v328, %v333
  %v338 = vadd.f32 %v329, %v334
  %v339 = vadd.f32 %v330, %v335
  %v340 = vadd.f32 %v331, %v336
  %v341 = vperm.slane %v317, 0
  %v342 = vmul.f32 %v137, %v341
  %v343 = vmul.f32 %v141, %v341
  %v344 = vmul.f32 %v145, %v341
  %v345 = vmul.f32 %v149, %v341
  %v346 = vadd.f32 %v337, %v342
  %v347 = vadd.f32 %v338, %v343
  %v348 = vadd.f32 %v339, %v344
  %v349 = vadd.f32 %v340, %v345
  %v350 = vadd.f32 %v346, %v163
  %v351 = vadd.f32 %v347, %v168
  %v352 = vadd.f32 %v348, %v173
  %v353 = vadd.f32 %v349, %v178
  %v354 = vmax.f32 %v350, 0.0
  %v355 = vmax.f32 %v351, 0.0
  %v356 = vmax.f32 %v352, 0.0
  %v357 = vmax.f32 %v353, 0.0
  %358 = vmatpush.msra.mxu0 0.0
  %359 = vmatpush.msra.mxu0 0.0
  %360 = vmatpush.msra.mxu0 0.0
  %361 = vmatpush.msra.mxu0 0.0
  %362 = vmatpush.msra.mxu0 0.0
  %363 = vmatpush.msra.mxu0 0.0
  %364 = vmatpush.msra.mxu0 0.0
  %365 = vmatpush.msra.mxu0 0.0
  %366 = vmatpush.msra.mxu0 0.0
  %367 = vmatpush.msra.mxu0 0.0
  %368 = vmatpush.msra.mxu0 0.0
  %369 = vmatpush.msra.mxu0 0.0
  %370 = vmatpush.msra.mxu0 %v357
  %371 = vmatpush.msra.mxu0 %v356
  %372 = vmatpush.msra.mxu0 %v355
  %373 = vmatpush.msra.mxu0 %v354
  %374 = vmatmul.f32.gmra.mxu0 %v210
  %v375 = vpop.f32.mrf.mxu0
  %v376 = vadd.f32 %v191, %v375
  %377 = vmatmul.f32.gmra.mxu0 %v213
  %v378 = vpop.f32.mrf.mxu0
  %v379 = vadd.f32 %v196, %v378
  %380 = vmatmul.f32.gmra.mxu0 %v216
  %v381 = vpop.f32.mrf.mxu0
  %v382 = vadd.f32 %v201, %v381
  %383 = vmatmul.f32.gmra.mxu0 %v219
  %v384 = vpop.f32.mrf.mxu0
  %v385 = vadd.f32 %v206, %v384
  %386 = vdwg.mxu0
  %v387 = vmax.f32 %v376, 0.0
  %v388 = vmax.f32 %v379, 0.0
  %v389 = vmax.f32 %v382, 0.0
  %v390 = vmax.f32 %v385, 0.0
  %v391 = vmul.f32 %v257, %v387
  %v392 = vmul.f32 %v262, %v388
  %v393 = vmul.f32 %v267, %v389
  %v394 = vmul.f32 %v272, %v390
  %v395 = vadd.f32 %v391, %v392
  %v396 = vadd.f32 %v395, %v393
  %v397 = vadd.f32 %v396, %v394
  %v398 = vrot.slane %v397, 4
  %v399 = vadd.f32 %v397, %v398
  %v400 = vrot.slane %v399, 2
  %v401 = vadd.f32 %v399, %v400
  %v402 = vrot.slane %v401, 1
  %v403 = vadd.f32 %v401, %v402
  %v404 = vadd.f32 %v403, %v292
  %v405 = vxor.u32 %v404, 2147483648
  %v406 = vmul.f32 %v405, 1.442695
  %v407 = vpow.pop %v406
  %v408 = vadd.f32 %v407, 1.0
  %v409 = vrcp.pop %v408
  %v410 = vmul.f32 %v408, %v409
  %v411 = vsub.f32 1.0, %v410
  %v412 = vmul.f32 %v409, %v411
  %v413 = vadd.f32 %v409, %v412
  %vm414 = vweird.f32 %v408
  %vm415 = vweird.f32 %v409
  %vm416 = vmor %vm414, %vm415
  %v417 = vsel %vm416, %v409, %v413
  %v418 = vand.u32 2147483647, %v408
  %vm419 = vcmp.eq.f32.partialorder %v418, 8.507059e+37
  %v420 = vand.u32 %v408, 2147483648
  %v421 = vor.u32 1.1754944e-38, %v420
  %v422 = vsel %vm419, %v421, %v417
  %v423 = vmul.f32 1.0, %v422
  %v424 = vsub.f32 1.0, %v423
  %v425 = vmul.f32 %v424, %v32
  %v426 = vmul.f32 %v423, %v34
  %v427 = vadd.f32 %v425, %v426
  %v428 = vadd.f32 %v33, %v427
  %v429 = vperm.slane %v30, 0
  %v430 = vmul.f32 %v63, %v429
  %v431 = vmul.f32 %v68, %v429
  %v432 = vmul.f32 %v73, %v429
  %v433 = vmul.f32 %v78, %v429
  %v434 = vperm.slane %v31, 0
  %v435 = vmul.f32 %v87, %v434
  %v436 = vmul.f32 %v91, %v434
  %v437 = vmul.f32 %v95, %v434
  %v438 = vmul.f32 %v99, %v434
  %v439 = vadd.f32 %v430, %v435
  %v440 = vadd.f32 %v431, %v436
  %v441 = vadd.f32 %v432, %v437
  %v442 = vadd.f32 %v433, %v438
  %v443 = vperm.slane %v36, 0
  %v444 = vmul.f32 %v112, %v443
  %v445 = vmul.f32 %v116, %v443
  %v446 = vmul.f32 %v120, %v443
  %v447 = vmul.f32 %v124, %v443
  %v448 = vadd.f32 %v439, %v444
  %v449 = vadd.f32 %v440, %v445
  %v450 = vadd.f32 %v441, %v446
  %v451 = vadd.f32 %v442, %v447
  %v452 = vperm.slane %v428, 0
  %v453 = vmul.f32 %v137, %v452
  %v454 = vmul.f32 %v141, %v452
  %v455 = vmul.f32 %v145, %v452
  %v456 = vmul.f32 %v149, %v452
  %v457 = vadd.f32 %v448, %v453
  %v458 = vadd.f32 %v449, %v454
  %v459 = vadd.f32 %v450, %v455
  %v460 = vadd.f32 %v451, %v456
  %v461 = vadd.f32 %v457, %v163
  %v462 = vadd.f32 %v458, %v168
  %v463 = vadd.f32 %v459, %v173
  %v464 = vadd.f32 %v460, %v178
  %v465 = vmax.f32 %v461, 0.0
  %v466 = vmax.f32 %v462, 0.0
  %v467 = vmax.f32 %v463, 0.0
  %v468 = vmax.f32 %v464, 0.0
  %469 = vmatpush.msra.mxu0 0.0
  %470 = vmatpush.msra.mxu0 0.0
  %471 = vmatpush.msra.mxu0 0.0
  %472 = vmatpush.msra.mxu0 0.0
  %473 = vmatpush.msra.mxu0 0.0
  %474 = vmatpush.msra.mxu0 0.0
  %475 = vmatpush.msra.mxu0 0.0
  %476 = vmatpush.msra.mxu0 0.0
  %477 = vmatpush.msra.mxu0 0.0
  %478 = vmatpush.msra.mxu0 0.0
  %479 = vmatpush.msra.mxu0 0.0
  %480 = vmatpush.msra.mxu0 0.0
  %481 = vmatpush.msra.mxu0 %v468
  %482 = vmatpush.msra.mxu0 %v467
  %483 = vmatpush.msra.mxu0 %v466
  %484 = vmatpush.msra.mxu0 %v465
  %485 = vmatmul.f32.gmra.mxu0 %v210
  %v486 = vpop.f32.mrf.mxu0
  %v487 = vadd.f32 %v191, %v486
  %488 = vmatmul.f32.gmra.mxu0 %v213
  %v489 = vpop.f32.mrf.mxu0
  %v490 = vadd.f32 %v196, %v489
  %491 = vmatmul.f32.gmra.mxu0 %v216
  %v492 = vpop.f32.mrf.mxu0
  %v493 = vadd.f32 %v201, %v492
  %494 = vmatmul.f32.gmra.mxu0 %v219
  %v495 = vpop.f32.mrf.mxu0
  %v496 = vadd.f32 %v206, %v495
  %497 = vdwg.mxu0
  %v498 = vmax.f32 %v487, 0.0
  %v499 = vmax.f32 %v490, 0.0
  %v500 = vmax.f32 %v493, 0.0
  %v501 = vmax.f32 %v496, 0.0
  %v502 = vmul.f32 %v257, %v498
  %v503 = vmul.f32 %v262, %v499
  %v504 = vmul.f32 %v267, %v500
  %v505 = vmul.f32 %v272, %v501
  %v506 = vadd.f32 %v502, %v503
  %v507 = vadd.f32 %v506, %v504
  %v508 = vadd.f32 %v507, %v505
  %v509 = vrot.slane %v508, 4
  %v510 = vadd.f32 %v508, %v509
  %v511 = vrot.slane %v510, 2
  %v512 = vadd.f32 %v510, %v511
  %v513 = vrot.slane %v512, 1
  %v514 = vadd.f32 %v512, %v513
  %v515 = vadd.f32 %v514, %v292
  %v516 = vxor.u32 %v515, 2147483648
  %v517 = vmul.f32 %v516, 1.442695
  %v518 = vpow.pop %v517
  %v519 = vadd.f32 %v518, 1.0
  %v520 = vrcp.pop %v519
  %v521 = vmul.f32 %v519, %v520
  %v522 = vsub.f32 1.0, %v521
  %v523 = vmul.f32 %v520, %v522
  %v524 = vadd.f32 %v520, %v523
  %vm525 = vweird.f32 %v519
  %vm526 = vweird.f32 %v520
  %vm527 = vmor %vm525, %vm526
  %v528 = vsel %vm527, %v520, %v524
  %v529 = vand.u32 2147483647, %v519
  %vm530 = vcmp.eq.f32.partialorder %v529, 8.507059e+37
  %v531 = vand.u32 %v519, 2147483648
  %v532 = vor.u32 1.1754944e-38, %v531
  %v533 = vsel %vm530, %v532, %v528
  %v534 = vmul.f32 1.0, %v533
  %v535 = vsub.f32 1.0, %v534
  %v536 = vmul.f32 %v535, %v30
  %v537 = vmul.f32 %v534, %v31
  %v538 = vadd.f32 %v536, %v537
  %539 = vst [vmem:[%s7] sm:$0x1] %v316
  %540 = vst [vmem:[%s7 + $0x1] sm:$0x1] %v538
  // Predicated region
  $region30: #{_calib_iter.1} parent=0 // pred_check
    _
  $region31: #{_calib_iter.1} parent=0 // pred_check_branch
    %542 = sbr.rel (0) target = $region33
  $region32: #{_calib_iter.1} parent=0 // pred_region
    _
  $region33: #{_calib_iter.1} parent=0 // pred_fallthru
    _
  // Predicated region
  $region34: #{_calib_iter.1} parent=0 // pred_check
    _
  $region35: #{_calib_iter.1} parent=0 // pred_check_branch
    %544 = sbr.rel (0) target = $region37
  $region36: #{_calib_iter.1} parent=0 // pred_region
    _
  $region37: #{_calib_iter.1} parent=0 // pred_fallthru
    _

</llo_original>
